<compile_context>
chip_gen: v7x
topology: tpu7x:2x2x1
jax: 0.10.0
libtpu: 0.0.40
codegen_flags: <defaults>
</compile_context>

<pallas_src>
import functools

import numpy as np

import jax
import jax.numpy as jnp
from jax.experimental import pallas as pl
from jax.experimental.pallas import tpu as pltpu


# --------------------------- sinusoidal table ------------------------------- #

@functools.lru_cache(maxsize=None)
def _get_encoding(d_model: int, length: int) -> jnp.ndarray:
    """Sinusoidal table identical to the PyTorch __init__ (only `length` rows).

    Built once on host with numpy and cached per (d_model, length); the jitted
    forward receives it as a plain device array (no per-call rebuild).
    """
    position = np.arange(length, dtype=np.float32)[:, None]                  # (L, 1)
    div_term = np.exp(
        np.arange(0, d_model, 2, dtype=np.float32)
        * -(np.float32(np.log(np.float32(10000.0))) / np.float32(d_model))
    )                                                                        # (ceil(d/2),)
    sin_part = np.sin(position * div_term)
    cos_part = np.cos(position * div_term)
    enc = np.zeros((length, d_model), dtype=np.float32)
    enc[:, 0::2] = sin_part
    if d_model % 2 == 0:
        enc[:, 1::2] = cos_part
    else:
        enc[:, 1::2] = cos_part[:, :-1]
    return jnp.asarray(enc)                                                  # (L, d_model)


# ------------------------------- kernel ------------------------------------- #

def _pe2d_kernel(x_ref, pe_ref, o_ref, *, nb: int, c: int):
    """x_ref: (nb, C, tS) native dtype; pe_ref: (tS, C) f32; o_ref: (tS, nb*C) f32.

    Per batch slice: cast on the VPU, XLU-transpose (C,tS)->(tS,C), add pe, and
    store into the lane slice [j*C, (j+1)*C) of the lane-dense output block.
    """
    pe = pe_ref[...]
    for j in range(nb):                       # static, tiny unroll (nb <= 4 fast path)
        o_ref[:, j * c:(j + 1) * c] = x_ref[j].astype(jnp.float32).T + pe


# --------------------------- tiling helpers --------------------------------- #

_BLOCK_VMEM_BUDGET = 20 * 1024 * 1024    # per-step working set (all blocks, 2-buffered)
_TS_CAP = 2048                           # per-step overhead amortized well before this
_VMEM_LIMIT_CAP = 48 * 1024 * 1024       # stay well under v7x's 64 MiB physical VMEM


def _bytes_per_ts(nb: int, C: int, in_bytes: int) -> int:
    """Double-buffered block bytes per unit of the spatial tile tS."""
    x_b = 2 * nb * C * in_bytes        # x block (nb, C, tS), native dtype
    o_b = 2 * nb * C * 4               # out block (tS, nb*C), f32
    pe_b = 2 * C * 4                   # pe block (tS, C), f32 (resident, count both bufs)
    tmp_b = 2 * C * 4                  # transpose temp (one (tS, C) f32 slice live)
    return x_b + o_b + pe_b + tmp_b


def _pick_group(B: int, C: int, in_bytes: int, S: int):
    """Batch elements per block on the lane-dense fast path (2-4 when it fits VMEM)."""
    for k in (4, 2, 1):
        if B % k:
            continue
        bpt = _bytes_per_ts(k, C, in_bytes)
        if min(S, 128) * bpt <= _BLOCK_VMEM_BUDGET:
            return k, bpt
    return 1, _bytes_per_ts(1, C, in_bytes)


def _choose_tile(S: int, bytes_per_ts: int, other_iters: int) -> int:
    """Spatial tile tS.

    Full S for small S (contiguous HBM slab per batch slice, no padded tail),
    otherwise the largest 128-aligned tile fitting the VMEM budget.  Keeps at
    least 2 grid steps along S when no other grid axis can feed v7x's 2nd TC.
    """
    if S < 128:
        return S                                           # full extent (always legal)
    full_ok = S * bytes_per_ts <= _BLOCK_VMEM_BUDGET
    want_split = other_iters < 2                           # leave work for the 2nd TC
    if S <= 512 and full_ok and not want_split:
        return S
    ts = max(128, (_BLOCK_VMEM_BUDGET // max(1, bytes_per_ts)) // 128 * 128)
    ts = min(ts, _TS_CAP, max(128, (S // 128) * 128))
    if want_split and S > 128:
        ts = min(ts, max(128, pl.cdiv(pl.cdiv(S, 2), 128) * 128))
    return int(ts)


def _vmem_limit(block_bytes: int) -> int:
    # Raise the scoped-VMEM limit above the v5e/v6e 16/32 MiB defaults, with
    # headroom for Mosaic internal scratch, clamped under v7x's 64 MiB physical.
    return int(min(max(block_bytes + (16 << 20), 32 << 20), _VMEM_LIMIT_CAP))


# ------------------------------ forward ------------------------------------- #

@jax.jit
def _pe2d_impl(x: jnp.ndarray, pe: jnp.ndarray) -> jnp.ndarray:
    B, C, H, W = x.shape
    S = pe.shape[0]                                   # == H * W
    x_flat = x.reshape(B, C, S)                       # NCHW -> (B, C, S), free, native dtype
    in_bytes = x.dtype.itemsize

    if C % 128 == 0:
        # ---- fast path: batch-grouped, lane-dense (tS, k*C) output blocks ----
        k, bpt = _pick_group(B, C, in_bytes, S)
        n_groups = B // k
        ts = _choose_tile(S, bpt, n_groups)
        grid = (pl.cdiv(S, ts), n_groups)             # group axis inner -> pe stays resident

        out2d = pl.pallas_call(
            functools.partial(_pe2d_kernel, nb=k, c=C),
            out_shape=jax.ShapeDtypeStruct((S, B * C), jnp.float32),
            grid_spec=pltpu.PrefetchScalarGridSpec(
                num_scalar_prefetch=0,
                grid=grid,
                in_specs=[
                    # x (B, C, S): k batch slices, each a contiguous (C, tS) slab.
                    pl.BlockSpec((k, C, ts), lambda s, b: (b, 0, s)),
                    # pe (S, C): index_map ignores b -> no re-DMA across the group axis.
                    pl.BlockSpec((ts, C), lambda s, b: (s, 0)),
                ],
                # out viewed as (S, B*C): lane-dense (tS, k*C) block at column-block b.
                out_specs=pl.BlockSpec((ts, k * C), lambda s, b: (s, b)),
            ),
            compiler_params=pltpu.CompilerParams(
                dimension_semantics=("parallel", "parallel"),
                vmem_limit_bytes=_vmem_limit(ts * bpt),
            ),
        )(x_flat, pe)
    else:
        # ---- fallback (C not 128-aligned, e.g. tiny test shapes) ----
        # Full batch per block so the output block spans the full B*C lane extent
        # (legal and far denser than a width-C masked-store block).
        bpt = _bytes_per_ts(B, C, in_bytes)
        ts = _choose_tile(S, bpt, 1)
        grid = (pl.cdiv(S, ts),)

        out2d = pl.pallas_call(
            functools.partial(_pe2d_kernel, nb=B, c=C),
            out_shape=jax.ShapeDtypeStruct((S, B * C), jnp.float32),
            grid_spec=pltpu.PrefetchScalarGridSpec(
                num_scalar_prefetch=0,
                grid=grid,
                in_specs=[
                    pl.BlockSpec((B, C, ts), lambda s: (0, 0, s)),
                    pl.BlockSpec((ts, C), lambda s: (s, 0)),
                ],
                out_specs=pl.BlockSpec((ts, B * C), lambda s: (s, 0)),
            ),
            compiler_params=pltpu.CompilerParams(
                dimension_semantics=("parallel",),
                vmem_limit_bytes=_vmem_limit(ts * bpt),
            ),
        )(x_flat, pe)

    return out2d.reshape(S, B, C)                     # trivial row-major reshape


def positional_encoding_2d(x: jnp.ndarray, max_len: int = 5000) -> jnp.ndarray:
    """x: (B, C, H, W) -> (H*W, B, C) float32, matching the PyTorch forward."""
    B, C, H, W = x.shape
    S = H * W
    assert S <= max_len, "sequence length exceeds max_len"
    pe = _get_encoding(C, S)                          # cached host-built table, (S, C) f32
    return _pe2d_impl(x, pe)


# ------------------------------ reference ----------------------------------- #

def _reference(x: jnp.ndarray) -> jnp.ndarray:
    B, C, H, W = x.shape
    S = H * W
    x_perm = jnp.transpose(x.reshape(B, C, S).astype(jnp.float32), (2, 0, 1))
    return x_perm + _get_encoding(C, S)[:, None, :]


if __name__ == "__main__":
    key = jax.random.PRNGKey(0)

    # Test 1: small channels (C % 128 != 0) -> lane-dense full-batch fallback path.
    B, C, H, W = 2, 4, 16, 16
    x = jax.random.normal(key, (B, C, H, W), dtype=jnp.float32)
    out = jax.block_until_ready(positional_encoding_2d(x))
    ref = _reference(x)
    assert out.shape == (H * W, B, C), out.shape
    assert jnp.allclose(out, ref, atol=1e-5, rtol=1e-5), "mismatch (fallback path)"

    # Test 2: lane-dense channels (C % 128 == 0) -> batch-grouped fast path.
    B2, C2, H2, W2 = 2, 128, 16, 16
    x2 = jax.random.normal(jax.random.PRNGKey(0), (B2, C2, H2, W2), dtype=jnp.float32)
    out2 = jax.block_until_ready(positional_encoding_2d(x2))
    ref2 = _reference(x2)
    assert out2.shape == (H2 * W2, B2, C2), out2.shape
    assert jnp.allclose(out2, ref2, atol=1e-5, rtol=1e-5), "mismatch (fast path)"

    # Test 3: bf16 input stays bf16 until the in-kernel cast (no wrapper f32 copy).
    x3 = jax.random.normal(jax.random.PRNGKey(0), (B2, C2, H2, W2), dtype=jnp.bfloat16)
    out3 = jax.block_until_ready(positional_encoding_2d(x3))
    ref3 = _reference(x3)
    assert out3.dtype == jnp.float32
    assert jnp.allclose(out3, ref3, atol=1e-2, rtol=1e-2), "mismatch (bf16 path)"

    print("KERNEL_OK")
</pallas_src>

<mosaic_0001>
module attributes {stable_mosaic.version = 11 : i64} {
  func.func @_pe2d_kernel(%arg0: i32, %arg1: memref<2x4x128xf32, #tpu.memory_space<vmem>>, %arg2: memref<128x4xf32, #tpu.memory_space<vmem>>, %arg3: memref<128x8xf32, #tpu.memory_space<vmem>>) attributes {dimension_semantics = [#tpu.dimension_semantics<parallel>], iteration_bounds = array<i64: 2>, scalar_prefetch = 0 : i64, scratch_operands = 0 : i64, tpu.core_type = #tpu.core_type<tc>, window_params = [{transform_indices = @transform_0, window_bounds = array<i64: 2, 4, 128>}, {transform_indices = @transform_1, window_bounds = array<i64: 128, 4>}, {transform_indices = @transform_2, window_bounds = array<i64: 128, 8>}]} {
    %c0 = arith.constant 0 : index
    %c0_0 = arith.constant 0 : index
    %0 = vector.load %arg2[%c0, %c0_0] : memref<128x4xf32, #tpu.memory_space<vmem>>, vector<128x4xf32>
    %c0_1 = arith.constant 0 : index
    %c0_2 = arith.constant 0 : index
    %c0_3 = arith.constant 0 : index
    %1 = vector.load %arg1[%c0_1, %c0_2, %c0_3] : memref<2x4x128xf32, #tpu.memory_space<vmem>>, vector<1x4x128xf32>
    %2 = vector.shape_cast %1 : vector<1x4x128xf32> to vector<4x128xf32>
    %3 = tpu.transpose %2, [1, 0] : vector<4x128xf32> -> vector<128x4xf32>
    %4 = arith.addf %3, %0 : vector<128x4xf32>
    %c0_4 = arith.constant 0 : index
    %c0_5 = arith.constant 0 : index
    %5 = vector.load %arg3[%c0_4, %c0_5] : memref<128x8xf32, #tpu.memory_space<vmem>>, vector<128x4xf32>
    tpu.vector_store %arg3[%c0_4, %c0_5], %4 {strides = array<i32>} : memref<128x8xf32, #tpu.memory_space<vmem>>, vector<128x4xf32>,
    %c1 = arith.constant 1 : index
    %c0_6 = arith.constant 0 : index
    %c0_7 = arith.constant 0 : index
    %6 = vector.load %arg1[%c1, %c0_6, %c0_7] : memref<2x4x128xf32, #tpu.memory_space<vmem>>, vector<1x4x128xf32>
    %7 = vector.shape_cast %6 : vector<1x4x128xf32> to vector<4x128xf32>
    %8 = tpu.transpose %7, [1, 0] : vector<4x128xf32> -> vector<128x4xf32>
    %9 = arith.addf %8, %0 : vector<128x4xf32>
    %c0_8 = arith.constant 0 : index
    %c4 = arith.constant 4 : index
    %10 = vector.load %arg3[%c0_8, %c4] : memref<128x8xf32, #tpu.memory_space<vmem>>, vector<128x4xf32>
    tpu.vector_store %arg3[%c0_8, %c4], %9 {strides = array<i32>} : memref<128x8xf32, #tpu.memory_space<vmem>>, vector<128x4xf32>,
    return
  }
  func.func @transform_0(%arg0: i32) -> (i32, i32, i32) {
    %c0_i32 = arith.constant 0 : i32
    %c0_i32_0 = arith.constant 0 : i32
    %c0_i32_1 = arith.constant 0 : i32
    return %c0_i32, %c0_i32_0, %arg0 : i32, i32, i32
  }
  func.func @transform_1(%arg0: i32) -> (i32, i32) {
    %c0_i32 = arith.constant 0 : i32
    %c0_i32_0 = arith.constant 0 : i32
    return %arg0, %c0_i32 : i32, i32
  }
  func.func @transform_2(%arg0: i32) -> (i32, i32) {
    %c0_i32 = arith.constant 0 : i32
    %c0_i32_0 = arith.constant 0 : i32
    return %arg0, %c0_i32 : i32, i32
  }
}

</mosaic_0001>

<llo_original>
// kernel: _pe2d_impl.1
$region0: #{_pe2d_impl.1}
  #allocation0 [shape = 'u32[]', space=smem, size = 0x4, offset = 0x4, fixed_abs, tag = 'smem constant byte address 0x4 - core index']
  #allocation1 [shape = 'u32[144,128]{1,0:T(1,128)}', space=vmem, size = 0x12000, scoped, tag = 'internal scratch']
  %s0 = inlined_call_operand.vmem [shape: f32[2,4,256], index: 0, kind: input, shape index: {}]
  %s1 = inlined_call_operand.vmem [shape: f32[256,4], index: 1, kind: input, shape index: {}]
  %s2 = inlined_call_operand.vmem [shape: f32[256,8], index: 2, kind: output, shape index: {}]
  %s3 = sld [smem:[#allocation0]]
  $region82: #{_pe2d_impl.1} parent=0
    _
  %s5 = ssub.s32 1, %s3
  %s6 = scalar_select 0, %s5, %s3
  $region1: #{_pe2d_impl.1} parent=0
    #allocation2 [shape = 'u8[8192]{0}', space=vmem, size = 0x2000, scoped, tag = 'input window, operand 0']
    loop: start=0, step=1, limit=4
    $region2: #{_pe2d_impl.1} parent=1 // loop_pre_header
      _
    $region3: #{_pe2d_impl.1} parent=1 // loop_header
      %s8 = sphi 0, %s12
      %p9 = scmp.ge.s32.totalorder %s8, 4
      %s18 = sphi 0, %s20
      %s21 = sphi 0, %s18
      %s22 = sphi 0, %s21
      %s38 = sphi 0, %s22
      %s44 = sphi 0, %s46
      %s47 = sphi 0, %s44
      %s48 = sphi 0, %s47
      %s64 = sphi 0, %s48
      %s70 = sphi 0, %s72
      %s73 = sphi 0, %s70
      %s74 = sphi 0, %s73
      %s90 = sphi 0, %s74
    $region4: #{_pe2d_impl.1} parent=1 // loop_header_branch
      %11 = sbr.rel (%p9) target = $region8
    $region5: #{_pe2d_impl.1} parent=1 // loop_body
      %s13 = ssub.s32 %s8, 1
      %s14 = ssub.s32 %s8, 2
      %s15 = sadd.s32 %s8, 1
      %s16 = ssub.s32 %s8, %s15
      %p17 = scmp.eq.s32.totalorder %s16, 0
      %s19 = sadd.s32 %s18, 1
      %s20 = scalar_select %p17, %s18, %s19
      %p23 = pneg %p17
      %p24 = scmp.eq.s32.totalorder %s8, 1
      %p25 = por %p23, %p24
      %p26 = scmp.ne.s32.totalorder %s18, %s21
      %p27 = scmp.eq.s32.totalorder %s8, 0
      %p28 = por %p26, %p27
      %p29 = scmp.ne.s32.totalorder %s18, %s21
      %p30 = scmp.eq.s32.totalorder %s13, 1
      %p31 = por %p29, %p30
      %p32 = scmp.ne.s32.totalorder %s21, %s22
      %p33 = scmp.eq.s32.totalorder %s13, 0
      %p34 = por %p32, %p33
      %p35 = scmp.ne.s32.totalorder %s21, %s22
      %p36 = scmp.eq.s32.totalorder %s14, 1
      %p37 = por %p35, %p36
      %p39 = scmp.ne.s32.totalorder %s22, %s38
      %p40 = scmp.eq.s32.totalorder %s14, 0
      %p41 = por %p39, %p40
      %s42 = ssub.s32 %s8, %s15
      %p43 = scmp.eq.s32.totalorder %s42, 0
      %s45 = sadd.s32 %s44, 1
      %s46 = scalar_select %p43, %s44, %s45
      %p49 = pneg %p43
      %p50 = scmp.eq.s32.totalorder %s8, 1
      %p51 = por %p49, %p50
      %p52 = scmp.ne.s32.totalorder %s44, %s47
      %p53 = scmp.eq.s32.totalorder %s8, 0
      %p54 = por %p52, %p53
      %p55 = scmp.ne.s32.totalorder %s44, %s47
      %p56 = scmp.eq.s32.totalorder %s13, 1
      %p57 = por %p55, %p56
      %p58 = scmp.ne.s32.totalorder %s47, %s48
      %p59 = scmp.eq.s32.totalorder %s13, 0
      %p60 = por %p58, %p59
      %p61 = scmp.ne.s32.totalorder %s47, %s48
      %p62 = scmp.eq.s32.totalorder %s14, 1
      %p63 = por %p61, %p62
      %p65 = scmp.ne.s32.totalorder %s48, %s64
      %p66 = scmp.eq.s32.totalorder %s14, 0
      %p67 = por %p65, %p66
      %s68 = ssub.s32 %s8, %s15
      %p69 = scmp.eq.s32.totalorder %s68, 0
      %s71 = sadd.s32 %s70, 1
      %s72 = scalar_select %p69, %s70, %s71
      %p75 = pneg %p69
      %p76 = scmp.eq.s32.totalorder %s8, 1
      %p77 = por %p75, %p76
      %p78 = scmp.ne.s32.totalorder %s70, %s73
      %p79 = scmp.eq.s32.totalorder %s8, 0
      %p80 = por %p78, %p79
      %p81 = scmp.ne.s32.totalorder %s70, %s73
      %p82 = scmp.eq.s32.totalorder %s13, 1
      %p83 = por %p81, %p82
      %p84 = scmp.ne.s32.totalorder %s73, %s74
      %p85 = scmp.eq.s32.totalorder %s13, 0
      %p86 = por %p84, %p85
      %p87 = scmp.ne.s32.totalorder %s73, %s74
      %p88 = scmp.eq.s32.totalorder %s14, 1
      %p89 = por %p87, %p88
      %p91 = scmp.ne.s32.totalorder %s74, %s90
      %p92 = scmp.eq.s32.totalorder %s14, 0
      %p93 = por %p91, %p92
      %p94 = scmp.le.s32.totalorder 1, %s8
      %p95 = scmp.lt.s32.totalorder %s8, 3
      %p96 = pnand %p94, %p95
      %p97 = pneg %p96
      // Predicated region
      $region9: #{_pe2d_impl.1} parent=5 // pred_check
        _
      $region10: #{_pe2d_impl.1} parent=5 // pred_check_branch
        %99 = sbr.rel (%p96) target = $region12
      $region11: #{_pe2d_impl.1} parent=5 // pred_region
        %s100 = ssub.s32 %s8, 1
      $region12: #{_pe2d_impl.1} parent=5 // pred_fallthru
        _
      %p101 = scmp.lt.s32.totalorder %s8, 2
      // Predicated region
      $region13: #{_pe2d_impl.1} parent=5 // pred_check
        %p102 = pneg %p101
      $region14: #{_pe2d_impl.1} parent=5 // pred_check_branch
        %104 = sbr.rel (%p102) target = $region16
      $region15: #{_pe2d_impl.1} parent=5 // pred_region
        // Predicated region
        $region17: #{_pe2d_impl.1} parent=15 // pred_check
          %p105 = pneg %p28
        $region18: #{_pe2d_impl.1} parent=15 // pred_check_branch
          %107 = sbr.rel (%p105) target = $region20
        $region19: #{_pe2d_impl.1} parent=15 // pred_region
          %s108 = sand.u32 %s18, 1
          %s109 = sand.u32 %s18, 1
          %s110 = smul.addr %s109, 8
          %s111 = scalar_lea.vmem [#allocation2], %s110
          %s112 = smul.addr %s8, 4
          %s113 = scalar_lea.vmem %s0, %s112
          // Predicated region
          $region21: #{_pe2d_impl.1} parent=19 // pred_check
            _
          $region22: #{_pe2d_impl.1} parent=19 // pred_check_branch
            %115 = sbr.rel (0) target = $region24
          $region23: #{_pe2d_impl.1} parent=19 // pred_region
            // Predicated region
            $region25: #{_pe2d_impl.1} parent=23 // pred_check
              _
            $region26: #{_pe2d_impl.1} parent=23 // pred_check_branch
              %117 = sbr.rel target = $region28
            $region27: #{_pe2d_impl.1} parent=23 // pred_region
              // Predicated region
              $region40: #{_pe2d_impl.1} parent=27 // pred_check
                _
              $region41: #{_pe2d_impl.1} parent=27 // pred_check_branch
                %134 = sbr.rel (0) target = $region43
              $region42: #{_pe2d_impl.1} parent=27 // pred_region
                loop: start=0, step=1, limit=1
                $region44: #{_pe2d_impl.1} parent=42 // loop_pre_header
                  _
                $region45: #{_pe2d_impl.1} parent=42 // loop_header
                  %s136 = sphi 0, %s140
                  %p137 = scmp.ge.s32.totalorder %s136, 1
                  %s141 = sphi %s113, %s113
                  %s142 = sphi %s111, %s111
                $region46: #{_pe2d_impl.1} parent=42 // loop_header_branch
                  %139 = sbr.rel (%p137) target = $region50
                $region47: #{_pe2d_impl.1} parent=42 // loop_body
                  _
                $region48: #{_pe2d_impl.1} parent=42 // loop_footer
                  %s140 = sadd.s32 1, %s136
                $region49: #{_pe2d_impl.1} parent=42 // loop_footer_branch
                  %135 = sbr.rel target = $region45
                $region50: #{_pe2d_impl.1} parent=42 // loop_exit
                  _
                loop: start=0, step=1, limit=1
                $region51: #{_pe2d_impl.1} parent=42 // loop_pre_header
                  _
                $region52: #{_pe2d_impl.1} parent=42 // loop_header
                  %s145 = sphi 0, %s149
                  %p146 = scmp.ge.s32.totalorder %s145, 1
                  %s150 = sphi %s113, %s113
                  %s151 = sphi %s111, %s111
                $region53: #{_pe2d_impl.1} parent=42 // loop_header_branch
                  %148 = sbr.rel (%p146) target = $region57
                $region54: #{_pe2d_impl.1} parent=42 // loop_body
                  %v152 = vld [vmem:[%s150] sm:$0xf]
                  %153 = vst [vmem:[%s151] sm:$0xf] %v152
                  %v154 = vld [vmem:[%s150 + $0x8] sm:$0xf]
                  %155 = vst [vmem:[%s151 + $0x4] sm:$0xf] %v154
                $region55: #{_pe2d_impl.1} parent=42 // loop_footer
                  %s149 = sadd.s32 1, %s145
                $region56: #{_pe2d_impl.1} parent=42 // loop_footer_branch
                  %144 = sbr.rel target = $region52
                $region57: #{_pe2d_impl.1} parent=42 // loop_exit
                  _
              $region43: #{_pe2d_impl.1} parent=27 // pred_fallthru
                _
            $region28: #{_pe2d_impl.1} parent=23 // pred_fallthru
              _
            // Predicated region
            $region29: #{_pe2d_impl.1} parent=23 // pred_check
              _
            $region30: #{_pe2d_impl.1} parent=23 // pred_check_branch
              %119 = sbr.rel (0) target = $region32
            $region31: #{_pe2d_impl.1} parent=23 // pred_region
              loop: start=0, step=1, limit=1
              $region33: #{_pe2d_impl.1} parent=31 // loop_pre_header
                _
              $region34: #{_pe2d_impl.1} parent=31 // loop_header
                %s122 = sphi 0, %s126
                %p123 = scmp.ge.s32.totalorder %s122, 1
                %s127 = sphi %s113, %s113
                %s128 = sphi %s111, %s111
              $region35: #{_pe2d_impl.1} parent=31 // loop_header_branch
                %125 = sbr.rel (%p123) target = $region39
              $region36: #{_pe2d_impl.1} parent=31 // loop_body
                %v129 = vld [vmem:[%s127] sm:$0xf]
                %130 = vst [vmem:[%s128] sm:$0xf] %v129
                %v131 = vld [vmem:[%s127 + $0x8] sm:$0xf]
                %132 = vst [vmem:[%s128 + $0x4] sm:$0xf] %v131
              $region37: #{_pe2d_impl.1} parent=31 // loop_footer
                %s126 = sadd.s32 1, %s122
              $region38: #{_pe2d_impl.1} parent=31 // loop_footer_branch
                %121 = sbr.rel target = $region34
              $region39: #{_pe2d_impl.1} parent=31 // loop_exit
                _
            $region32: #{_pe2d_impl.1} parent=23 // pred_fallthru
              _
          $region24: #{_pe2d_impl.1} parent=19 // pred_fallthru
            _
          %156 = vnop
        $region20: #{_pe2d_impl.1} parent=15 // pred_fallthru
          _
        // Predicated region
        $region58: #{_pe2d_impl.1} parent=15 // pred_check
          %p157 = pneg %p54
        $region59: #{_pe2d_impl.1} parent=15 // pred_check_branch
          %159 = sbr.rel (%p157) target = $region61
        $region60: #{_pe2d_impl.1} parent=15 // pred_region
          %s160 = smul.u32 16, %s8
          %p161 = scmp.lt.s32.totalorder %s160, 31
          %s162 = scalar_select %p161, %s160, 31
          %s163 = smul.addr %s162, 8
          %s164 = scalar_lea.vmem %s1, %s163
          %s165 = smul.u32 16, %s8
        $region61: #{_pe2d_impl.1} parent=15 // pred_fallthru
          _
      $region16: #{_pe2d_impl.1} parent=5 // pred_fallthru
        _
      %p166 = scmp.le.s32.totalorder 1, %s8
      %p167 = scmp.lt.s32.totalorder %s8, 3
      %p168 = pnand %p166, %p167
      %p169 = pneg %p168
      // Predicated region
      $region62: #{_pe2d_impl.1} parent=5 // pred_check
        _
      $region63: #{_pe2d_impl.1} parent=5 // pred_check_branch
        %171 = sbr.rel (%p168) target = $region65
      $region64: #{_pe2d_impl.1} parent=5 // pred_region
        %s172 = ssub.s32 %s8, 1
        %s173 = sand.u32 %s21, 1
        %s174 = sand.u32 %s21, 1
        %s175 = smul.addr %s174, 8
        %s176 = scalar_lea.vmem [#allocation2], %s175
        // Predicated region
        $region66: #{_pe2d_impl.1} parent=64 // pred_check
          %p177 = pneg %p34
        $region67: #{_pe2d_impl.1} parent=64 // pred_check_branch
          %179 = sbr.rel (%p177) target = $region69
        $region68: #{_pe2d_impl.1} parent=64 // pred_region
          _
        $region69: #{_pe2d_impl.1} parent=64 // pred_fallthru
          _
        %s180 = sand.u32 %s21, 1
        %s181 = sand.u32 %s21, 1
        %s182 = smul.addr %s181, 8
        %s183 = scalar_lea.vmem [#allocation2], %s182
        %p184 = pneg %p34
        %p185 = pneg %p31
        %s186 = smul.u32 16, %s13
        %p187 = scmp.lt.s32.totalorder %s186, 31
        %s188 = scalar_select %p187, %s186, 31
        %s189 = smul.addr %s188, 8
        %s190 = scalar_lea.vmem %s1, %s189
        %p191 = pneg %p60
        %p192 = pneg %p57
        %p193 = pneg %p86
        %p194 = pneg %p83
        %s195 = smul.u32 16, %s13
        %p196 = scmp.lt.s32.totalorder %s195, 31
        %s197 = scalar_select %p196, %s195, 31
        %s198 = smul.addr %s197, 8
        %s199 = scalar_lea.vmem %s2, %s198
        %s200 = smul.u32 16, %s13
        %p201 = scmp.lt.s32.totalorder %s200, 31
        %s202 = scalar_select %p201, %s200, 31
        %s203 = smul.addr %s202, 8
        %s204 = scalar_lea.vmem %s1, %s203
        %s205 = smul.u32 16, %s13
        %s206 = smul.u32 16, %s13
        %p207 = scmp.lt.s32.totalorder %s206, 31
        %s208 = scalar_select %p207, %s206, 31
        %s209 = smul.addr %s208, 8
        %s210 = scalar_lea.vmem %s2, %s209
        %s211 = smul.u32 16, %s13
        %v212 = vld [vmem:[%s204] sm:$0xff]
        %v213 = vld [vmem:[%s204 + $0x8] sm:$0xff]
        %v214 = vld [vmem:[%s204 + $0x10] sm:$0xff]
        %v215 = vld [vmem:[%s204 + $0x18] sm:$0xff]
        %v216 = vld [vmem:[%s204 + $0x20] sm:$0xff]
        %v217 = vld [vmem:[%s204 + $0x28] sm:$0xff]
        %v218 = vld [vmem:[%s204 + $0x30] sm:$0xff]
        %v219 = vld [vmem:[%s204 + $0x38] sm:$0xff]
        %v220 = vld [vmem:[%s204 + $0x40] sm:$0xff]
        %v221 = vld [vmem:[%s204 + $0x48] sm:$0xff]
        %v222 = vld [vmem:[%s204 + $0x50] sm:$0xff]
        %v223 = vld [vmem:[%s204 + $0x58] sm:$0xff]
        %v224 = vld [vmem:[%s204 + $0x60] sm:$0xff]
        %v225 = vld [vmem:[%s204 + $0x68] sm:$0xff]
        %v226 = vld [vmem:[%s204 + $0x70] sm:$0xff]
        %v227 = vld [vmem:[%s204 + $0x78] sm:$0xff]
        %v228 = vld [vmem:[%s176] sm:$0xf]
        %229 = vxpose.xlu0.b32.start [1/16] %v228, 128
        %230 = vxpose.xlu0.b32.cont [2/16] 0.0, 128
        %231 = vxpose.xlu0.b32.cont [3/16] 0.0, 128
        %232 = vxpose.xlu0.b32.cont [4/16] 0.0, 128
        %233 = vxpose.xlu0.b32.cont [5/16] 0.0, 128
        %234 = vxpose.xlu0.b32.cont [6/16] 0.0, 128
        %235 = vxpose.xlu0.b32.cont [7/16] 0.0, 128
        %236 = vxpose.xlu0.b32.cont [8/16] 0.0, 128
        %237 = vxpose.xlu0.b32.cont [9/16] 0.0, 128
        %238 = vxpose.xlu0.b32.cont [10/16] 0.0, 128
        %239 = vxpose.xlu0.b32.cont [11/16] 0.0, 128
        %240 = vxpose.xlu0.b32.cont [12/16] 0.0, 128
        %241 = vxpose.xlu0.b32.cont [13/16] 0.0, 128
        %242 = vxpose.xlu0.b32.cont [14/16] 0.0, 128
        %243 = vxpose.xlu0.b32.cont [15/16] 0.0, 128
        %244 = vxpose.xlu0.b32.end [16/16] 0.0, 128
        %v245 = vpop.trf.xlu0
        %v246 = vpop.trf.xlu0
        %v247 = vpop.trf.xlu0
        %v248 = vpop.trf.xlu0
        %v249 = vpop.trf.xlu0
        %v250 = vpop.trf.xlu0
        %v251 = vpop.trf.xlu0
        %v252 = vpop.trf.xlu0
        %v253 = vpop.trf.xlu0
        %v254 = vpop.trf.xlu0
        %v255 = vpop.trf.xlu0
        %v256 = vpop.trf.xlu0
        %v257 = vpop.trf.xlu0
        %v258 = vpop.trf.xlu0
        %v259 = vpop.trf.xlu0
        %v260 = vpop.trf.xlu0
        %v261 = vadd.f32 %v245, %v212
        %v262 = vadd.f32 %v246, %v213
        %v263 = vadd.f32 %v247, %v214
        %v264 = vadd.f32 %v248, %v215
        %v265 = vadd.f32 %v249, %v216
        %v266 = vadd.f32 %v250, %v217
        %v267 = vadd.f32 %v251, %v218
        %v268 = vadd.f32 %v252, %v219
        %v269 = vadd.f32 %v253, %v220
        %v270 = vadd.f32 %v254, %v221
        %v271 = vadd.f32 %v255, %v222
        %v272 = vadd.f32 %v256, %v223
        %v273 = vadd.f32 %v257, %v224
        %v274 = vadd.f32 %v258, %v225
        %v275 = vadd.f32 %v259, %v226
        %v276 = vadd.f32 %v260, %v227
        %vm277 = vcmask 31744
        %278 = vst.msk [vmem:[%s210] sm:$0xff] %vm277, %v261
        %279 = vst.msk [vmem:[%s210 + $0x8] sm:$0xff] %vm277, %v262
        %280 = vst.msk [vmem:[%s210 + $0x10] sm:$0xff] %vm277, %v263
        %281 = vst.msk [vmem:[%s210 + $0x18] sm:$0xff] %vm277, %v264
        %282 = vst.msk [vmem:[%s210 + $0x20] sm:$0xff] %vm277, %v265
        %283 = vst.msk [vmem:[%s210 + $0x28] sm:$0xff] %vm277, %v266
        %284 = vst.msk [vmem:[%s210 + $0x30] sm:$0xff] %vm277, %v267
        %285 = vst.msk [vmem:[%s210 + $0x38] sm:$0xff] %vm277, %v268
        %286 = vst.msk [vmem:[%s210 + $0x40] sm:$0xff] %vm277, %v269
        %287 = vst.msk [vmem:[%s210 + $0x48] sm:$0xff] %vm277, %v270
        %288 = vst.msk [vmem:[%s210 + $0x50] sm:$0xff] %vm277, %v271
        %289 = vst.msk [vmem:[%s210 + $0x58] sm:$0xff] %vm277, %v272
        %290 = vst.msk [vmem:[%s210 + $0x60] sm:$0xff] %vm277, %v273
        %291 = vst.msk [vmem:[%s210 + $0x68] sm:$0xff] %vm277, %v274
        %292 = vst.msk [vmem:[%s210 + $0x70] sm:$0xff] %vm277, %v275
        %293 = vst.msk [vmem:[%s210 + $0x78] sm:$0xff] %vm277, %v276
        %s294 = scalar_lea.vmem %s176, 4 [#allocation2]
        %v295 = vld [vmem:[%s294] sm:$0xf]
        %296 = vxpose.xlu0.b32.start [1/16] %v295, 128
        %297 = vxpose.xlu0.b32.cont [2/16] 0.0, 128
        %298 = vxpose.xlu0.b32.cont [3/16] 0.0, 128
        %299 = vxpose.xlu0.b32.cont [4/16] 0.0, 128
        %300 = vxpose.xlu0.b32.cont [5/16] 0.0, 128
        %301 = vxpose.xlu0.b32.cont [6/16] 0.0, 128
        %302 = vxpose.xlu0.b32.cont [7/16] 0.0, 128
        %303 = vxpose.xlu0.b32.cont [8/16] 0.0, 128
        %304 = vxpose.xlu0.b32.cont [9/16] 0.0, 128
        %305 = vxpose.xlu0.b32.cont [10/16] 0.0, 128
        %306 = vxpose.xlu0.b32.cont [11/16] 0.0, 128
        %307 = vxpose.xlu0.b32.cont [12/16] 0.0, 128
        %308 = vxpose.xlu0.b32.cont [13/16] 0.0, 128
        %309 = vxpose.xlu0.b32.cont [14/16] 0.0, 128
        %310 = vxpose.xlu0.b32.cont [15/16] 0.0, 128
        %311 = vxpose.xlu0.b32.end [16/16] 0.0, 128
        %v312 = vpop.trf.xlu0
        %v313 = vpop.trf.xlu0
        %v314 = vpop.trf.xlu0
        %v315 = vpop.trf.xlu0
        %v316 = vpop.trf.xlu0
        %v317 = vpop.trf.xlu0
        %v318 = vpop.trf.xlu0
        %v319 = vpop.trf.xlu0
        %v320 = vpop.trf.xlu0
        %v321 = vpop.trf.xlu0
        %v322 = vpop.trf.xlu0
        %v323 = vpop.trf.xlu0
        %v324 = vpop.trf.xlu0
        %v325 = vpop.trf.xlu0
        %v326 = vpop.trf.xlu0
        %v327 = vpop.trf.xlu0
        %v328 = vadd.f32 %v312, %v212
        %v329 = vadd.f32 %v313, %v213
        %v330 = vadd.f32 %v314, %v214
        %v331 = vadd.f32 %v315, %v215
        %v332 = vadd.f32 %v316, %v216
        %v333 = vadd.f32 %v317, %v217
        %v334 = vadd.f32 %v318, %v218
        %v335 = vadd.f32 %v319, %v219
        %v336 = vadd.f32 %v320, %v220
        %v337 = vadd.f32 %v321, %v221
        %v338 = vadd.f32 %v322, %v222
        %v339 = vadd.f32 %v323, %v223
        %v340 = vadd.f32 %v324, %v224
        %v341 = vadd.f32 %v325, %v225
        %v342 = vadd.f32 %v326, %v226
        %v343 = vadd.f32 %v327, %v227
        %360 = vrot.lane.b32.xlu0 %v328, 4
        %v361 = vpop.permute.xlu0 %360
        %362 = vrot.lane.b32.xlu0 %v329, 4
        %v363 = vpop.permute.xlu0 %362
        %364 = vrot.lane.b32.xlu0 %v330, 4
        %v365 = vpop.permute.xlu0 %364
        %366 = vrot.lane.b32.xlu0 %v331, 4
        %v367 = vpop.permute.xlu0 %366
        %368 = vrot.lane.b32.xlu0 %v332, 4
        %v369 = vpop.permute.xlu0 %368
        %370 = vrot.lane.b32.xlu0 %v333, 4
        %v371 = vpop.permute.xlu0 %370
        %372 = vrot.lane.b32.xlu0 %v334, 4
        %v373 = vpop.permute.xlu0 %372
        %374 = vrot.lane.b32.xlu0 %v335, 4
        %v375 = vpop.permute.xlu0 %374
        %376 = vrot.lane.b32.xlu0 %v336, 4
        %v377 = vpop.permute.xlu0 %376
        %378 = vrot.lane.b32.xlu0 %v337, 4
        %v379 = vpop.permute.xlu0 %378
        %380 = vrot.lane.b32.xlu0 %v338, 4
        %v381 = vpop.permute.xlu0 %380
        %382 = vrot.lane.b32.xlu0 %v339, 4
        %v383 = vpop.permute.xlu0 %382
        %384 = vrot.lane.b32.xlu0 %v340, 4
        %v385 = vpop.permute.xlu0 %384
        %386 = vrot.lane.b32.xlu0 %v341, 4
        %v387 = vpop.permute.xlu0 %386
        %388 = vrot.lane.b32.xlu0 %v342, 4
        %v389 = vpop.permute.xlu0 %388
        %390 = vrot.lane.b32.xlu0 %v343, 4
        %v391 = vpop.permute.xlu0 %390
        %vm408 = vcmask 64544
        %409 = vst.msk [vmem:[%s210] sm:$0xff] %vm408, %v361
        %410 = vst.msk [vmem:[%s210 + $0x8] sm:$0xff] %vm408, %v363
        %411 = vst.msk [vmem:[%s210 + $0x10] sm:$0xff] %vm408, %v365
        %412 = vst.msk [vmem:[%s210 + $0x18] sm:$0xff] %vm408, %v367
        %413 = vst.msk [vmem:[%s210 + $0x20] sm:$0xff] %vm408, %v369
        %414 = vst.msk [vmem:[%s210 + $0x28] sm:$0xff] %vm408, %v371
        %415 = vst.msk [vmem:[%s210 + $0x30] sm:$0xff] %vm408, %v373
        %416 = vst.msk [vmem:[%s210 + $0x38] sm:$0xff] %vm408, %v375
        %417 = vst.msk [vmem:[%s210 + $0x40] sm:$0xff] %vm408, %v377
        %418 = vst.msk [vmem:[%s210 + $0x48] sm:$0xff] %vm408, %v379
        %419 = vst.msk [vmem:[%s210 + $0x50] sm:$0xff] %vm408, %v381
        %420 = vst.msk [vmem:[%s210 + $0x58] sm:$0xff] %vm408, %v383
        %421 = vst.msk [vmem:[%s210 + $0x60] sm:$0xff] %vm408, %v385
        %422 = vst.msk [vmem:[%s210 + $0x68] sm:$0xff] %vm408, %v387
        %423 = vst.msk [vmem:[%s210 + $0x70] sm:$0xff] %vm408, %v389
        %424 = vst.msk [vmem:[%s210 + $0x78] sm:$0xff] %vm408, %v391
        %s425 = smul.u32 16, %s13
        %p426 = scmp.lt.s32.totalorder %s425, 31
        %s427 = scalar_select %p426, %s425, 31
        %s428 = smul.addr %s427, 8
        %s429 = scalar_lea.vmem %s2, %s428
        // Predicated region
        $region70: #{_pe2d_impl.1} parent=64 // pred_check
          %p430 = pneg %p83
        $region71: #{_pe2d_impl.1} parent=64 // pred_check_branch
          %432 = sbr.rel (%p430) target = $region73
        $region72: #{_pe2d_impl.1} parent=64 // pred_region
          %s433 = smul.u32 16, %s13
        $region73: #{_pe2d_impl.1} parent=64 // pred_fallthru
          _
      $region65: #{_pe2d_impl.1} parent=5 // pred_fallthru
        _
      %p434 = scmp.le.s32.totalorder 2, %s8
      // Predicated region
      $region74: #{_pe2d_impl.1} parent=5 // pred_check
        %p435 = pneg %p434
      $region75: #{_pe2d_impl.1} parent=5 // pred_check_branch
        %437 = sbr.rel (%p435) target = $region77
      $region76: #{_pe2d_impl.1} parent=5 // pred_region
        %s438 = ssub.s32 %s8, 2
        // Predicated region
        $region78: #{_pe2d_impl.1} parent=76 // pred_check
          %p439 = pneg %p89
        $region79: #{_pe2d_impl.1} parent=76 // pred_check_branch
          %441 = sbr.rel (%p439) target = $region81
        $region80: #{_pe2d_impl.1} parent=76 // pred_region
          %s442 = smul.u32 16, %s14
          %p443 = scmp.lt.s32.totalorder %s442, 31
          %s444 = scalar_select %p443, %s442, 31
          %s445 = smul.addr %s444, 8
          %s446 = scalar_lea.vmem %s2, %s445
        $region81: #{_pe2d_impl.1} parent=76 // pred_fallthru
          _
      $region77: #{_pe2d_impl.1} parent=5 // pred_fallthru
        _
    $region6: #{_pe2d_impl.1} parent=1 // loop_footer
      %s12 = sadd.s32 1, %s8
    $region7: #{_pe2d_impl.1} parent=1 // loop_footer_branch
      %7 = sbr.rel target = $region3
    $region8: #{_pe2d_impl.1} parent=1 // loop_exit
      _

</llo_original>
